<compile_context>
chip_gen: v7x
topology: tpu7x:2x2x1
jax: 0.10.0
libtpu: 0.0.40
codegen_flags: <defaults>
</compile_context>

<pallas_src>
import functools

import jax
import jax.numpy as jnp
from jax import lax
from jax.experimental import pallas as pl
from jax.experimental.pallas import tpu as pltpu


def _step_partials(x, lane_width):
    """Reduce a (bt, C, T) step block to (bt, C, lane_width) partials using only
    lane-aligned VPU adds/maxes (no cross-lane XLU work).  Requires
    T % lane_width == 0 and x >= 0 (post-ReLU)."""
    t = x.shape[-1]
    ps = pm = None
    for lo in range(0, t, lane_width):
        c = x[:, :, lo:lo + lane_width]
        ps = c if ps is None else ps + c
        pm = c if pm is None else jnp.maximum(pm, c)
    return ps, pm


def _channel_attention_kernel(x_ref, w1t_ref, w2t_ref, o_ref,
                              sum_acc, max_acc, *, hw, hw_tile, actv):
    # x_ref:   (bt, C, hw_tile)      w1t_ref: (C, Cr)      w2t_ref: (Cr, C)
    # o_ref:   (bt, C)
    # sum_acc / max_acc: (bt, C, LW) f32 scratch, LW in {1, 128}
    k = pl.program_id(1)
    k_last = pl.num_programs(1) - 1
    lane_width = sum_acc.shape[-1]

    @pl.when(k == 0)
    def _init():
        sum_acc[...] = jnp.zeros_like(sum_acc)
        # Pooling happens AFTER the module's relu1, so 0 is a valid max identity.
        max_acc[...] = jnp.zeros_like(max_acc)

    def accumulate(x):
        if lane_width > 1:
            # Deferred cross-lane reduce: pure VPU in the streaming loop.
            ps, pm = _step_partials(x, lane_width)
            sum_acc[...] += ps
            max_acc[...] = jnp.maximum(max_acc[...], pm)
        else:
            # Direct per-step reduce (steps are long; XLU cost is amortized).
            sum_acc[...] += jnp.sum(x, axis=-1, keepdims=True)
            max_acc[...] = jnp.maximum(max_acc[...],
                                       jnp.max(x, axis=-1, keepdims=True))

    if hw % hw_tile == 0:
        # No spatial tail at all -> no mask anywhere in the hot loop.
        accumulate(jnp.maximum(x_ref[...].astype(jnp.float32), 0.0))
    else:
        @pl.when(k != k_last)
        def _full_tiles():           # hot loop: unmasked
            accumulate(jnp.maximum(x_ref[...].astype(jnp.float32), 0.0))

        @pl.when(k == k_last)
        def _tail_tile():            # only the last (partial) tile pays the mask
            x = jnp.maximum(x_ref[...].astype(jnp.float32), 0.0)
            pos = (k * hw_tile
                   + lax.broadcasted_iota(jnp.int32, (1, 1, hw_tile), 2))
            accumulate(jnp.where(pos < hw, x, 0.0))   # 0 valid for sum & max

    @pl.when(k == k_last)
    def _finalize():
        avg = jnp.sum(sum_acc[...], axis=-1) * (1.0 / hw)   # (bt, C)
        mx = jnp.max(max_acc[...], axis=-1)                 # (bt, C)
        w1t = w1t_ref[...]
        w2t = w2t_ref[...]
        # fc2(relu(fc1(avg))) + fc2(relu(fc1(max)))
        #   == (relu(avg @ W1t) + relu(max @ W1t)) @ W2t   (fc2 is linear)
        h = (jnp.maximum(jnp.dot(avg, w1t, preferred_element_type=jnp.float32), 0.0)
             + jnp.maximum(jnp.dot(mx, w1t, preferred_element_type=jnp.float32), 0.0))
        out = jnp.dot(h, w2t, preferred_element_type=jnp.float32)

        if actv == "sigmoid":
            out = jax.nn.sigmoid(out)
        elif actv == "relu":
            out = jnp.maximum(out, 0.0)
        elif actv == "softplus":
            # nn.Softplus(beta=1, threshold=20): linear above the threshold.
            out = jnp.where(out > 20.0, out,
                            jnp.log1p(jnp.exp(jnp.minimum(out, 20.0))))
        o_ref[...] = out.astype(o_ref.dtype)


def _pick_tiles(B, C, HW, itemsize,
                x_block_budget=12 * 1024 * 1024,
                vmem_budget=44 * 1024 * 1024):
    """Pick (batch_tile, hw_tile).

    * Each streamed x block targets ~12 MiB (amortizes the ~0.35us/step grid
      overhead even at v7x's ~3.2 TB/s HBM) while double-buffered blocks plus
      scratch stay under ~44 MiB (headroom under v7x's 64 MiB physical VMEM).
    * bt is a multiple of 8 (or the full batch) and, when B >= 16, capped so
      grid[0] >= 2 and both v7x TensorCores receive batch blocks.
    * hw_tile is the full HW, or a multiple of 128 (preferring a divisor of HW
      so the masked-tail branch disappears entirely), never exceeding HW.
    """
    bytes_per_image = max(1, C * HW * itemsize)

    # ---- batch tile (second-minor dim of the output block) -----------------
    if B <= 8:
        bt = B
    else:
        imgs = max(8, (x_block_budget // bytes_per_image) // 8 * 8)
        cap = max(8, (B // 2) // 8 * 8) if B >= 16 else 8
        bt = min(imgs, cap)

    # ---- reserve VMEM for scratch/out/weights; split the rest over 2 buffers
    overhead = (2 * bt * C * 128 * 4              # sum/max accumulators (bound)
                + 2 * bt * C * itemsize           # output block
                + 4 * C * max(1, C // 16) * 4     # resident fc1/fc2 weights
                + (2 << 20))                      # margin
    per_block = min(x_block_budget, max(1 << 20, (vmem_budget - overhead) // 2))

    # ---- spatial tile -------------------------------------------------------
    hw_budget = max(1, per_block // (bt * C * itemsize))
    if HW <= hw_budget or HW <= 128:
        hw_tile = HW                                     # whole image, no tail
    else:
        t = min(max(128, (hw_budget // 128) * 128), (HW // 128) * 128)
        hw_tile = t
        d = t
        while d >= 128:                                  # prefer a divisor of HW
            if HW % d == 0:
                if 2 * d >= t or d >= 1024:
                    hw_tile = d
                break
            d -= 128
    return bt, hw_tile


def channel_attention(x_nchw, w1, w2, actv="sigmoid",
                      x_block_budget=12 * 1024 * 1024,
                      vmem_budget=44 * 1024 * 1024):
    """ChannelAttention forward.

    x_nchw: (B, C, H, W) float32 or bfloat16
    w1:     (C // 16, C)  -- fc1 (Conv2d 1x1, no bias) weight, squeezed
    w2:     (C, C // 16)  -- fc2 (Conv2d 1x1, no bias) weight, squeezed
    returns (B, C, 1, 1)
    """
    if actv not in ("sigmoid", "relu", "softplus"):
        raise ValueError(f"unsupported actv: {actv}")

    B, C, H, W = x_nchw.shape
    HW = H * W
    Cr = w1.shape[0]

    # Free contiguous reshape of NCHW -- no HBM transpose of the big tensor.
    x = x_nchw.reshape(B, C, HW)
    w1t = jnp.transpose(w1)   # (C, Cr)  tiny, VMEM-resident
    w2t = jnp.transpose(w2)   # (Cr, C)  tiny

    itemsize = x.dtype.itemsize
    bt, hw_tile = _pick_tiles(B, C, HW, itemsize, x_block_budget, vmem_budget)
    nk = -(-HW // hw_tile)

    # Deferred cross-lane reduce only when the streaming steps are short enough
    # for the per-step XLU reduce to matter, and the wider accumulators stay
    # cheap in VMEM.
    defer = (nk > 1 and hw_tile <= 1024 and hw_tile % 128 == 0
             and bt * C * 128 * 8 <= (8 << 20))
    lw = 128 if defer else 1

    # Scoped-VMEM limit computed from the actual plan (never below 48 MiB).
    x_block_bytes = bt * C * hw_tile * itemsize
    need = (2 * x_block_bytes            # double-buffered x blocks
            + 2 * bt * C * lw * 4        # sum/max accumulators
            + 2 * bt * C * itemsize      # output block
            + 4 * C * Cr * 4             # weights
            + (4 << 20))                 # margin
    vmem_limit = int(max(need, 48 * 1024 * 1024))

    kernel = functools.partial(_channel_attention_kernel,
                               hw=HW, hw_tile=hw_tile, actv=actv)

    out = pl.pallas_call(
        kernel,
        out_shape=jax.ShapeDtypeStruct((B, C), x.dtype),
        grid_spec=pltpu.PrefetchScalarGridSpec(
            num_scalar_prefetch=0,
            grid=(pl.cdiv(B, bt), nk),
            in_specs=[
                pl.BlockSpec((bt, C, hw_tile), lambda b, k: (b, 0, k)),
                pl.BlockSpec((C, Cr), lambda b, k: (0, 0)),
                pl.BlockSpec((Cr, C), lambda b, k: (0, 0)),
            ],
            out_specs=pl.BlockSpec((bt, C), lambda b, k: (b, 0)),
            scratch_shapes=[
                pltpu.VMEM((bt, C, lw), jnp.float32),   # running sum partials
                pltpu.VMEM((bt, C, lw), jnp.float32),   # running max partials
            ],
        ),
        compiler_params=pltpu.CompilerParams(
            # "parallel" batch axis -> sharded across the two v7x TensorCores;
            # the HW axis is a reduction -> "arbitrary" (and last).
            dimension_semantics=("parallel", "arbitrary"),
            vmem_limit_bytes=vmem_limit,
        ),
    )(x, w1t, w2t)

    return out.reshape(B, C, 1, 1)


def _reference(x, w1, w2, actv):
    """Pure-JAX replica of the PyTorch forward."""
    xr = jnp.maximum(x, 0.0)
    avg = jnp.mean(xr, axis=(2, 3))          # (B, C)
    mx = jnp.max(xr, axis=(2, 3))            # (B, C)

    def mlp(p):
        return jnp.maximum(p @ w1.T, 0.0) @ w2.T

    out = mlp(avg) + mlp(mx)
    if actv == "sigmoid":
        out = jax.nn.sigmoid(out)
    elif actv == "relu":
        out = jnp.maximum(out, 0.0)
    else:
        out = jnp.where(out > 20.0, out,
                        jnp.log1p(jnp.exp(jnp.minimum(out, 20.0))))
    return out.reshape(x.shape[0], x.shape[1], 1, 1)


if __name__ == "__main__":
    # NOTE: the module hardcodes `// 16` for the bottleneck regardless of
    # `ratio`, so channels must be >= 16.
    key = jax.random.PRNGKey(0)
    k1, k2, k3, k4 = jax.random.split(key, 4)

    C = 32
    Cr = C // 16
    w1 = jax.random.normal(k2, (Cr, C), dtype=jnp.float32) * 0.1
    w2 = jax.random.normal(k3, (C, Cr), dtype=jnp.float32) * 0.1

    # Case 1: small canonical shape (single streaming step).
    B, H, W = 2, 16, 16
    x = jax.random.normal(k1, (B, C, H, W), dtype=jnp.float32)
    out = jax.block_until_ready(channel_attention(x, w1, w2, actv="sigmoid"))
    ref = _reference(x, w1, w2, "sigmoid")
    assert out.shape == (B, C, 1, 1), out.shape
    assert jnp.allclose(out, ref, atol=1e-5, rtol=1e-5), "case 1 mismatch"

    # Case 2: force multi-step streaming + deferred lane-partial accumulators
    # + the masked spatial tail (HW=324 is not a multiple of the 128 tile).
    B2, H2, W2 = 3, 18, 18
    x2 = jax.random.normal(k4, (B2, C, H2, W2), dtype=jnp.float32)
    out2 = jax.block_until_ready(
        channel_attention(x2, w1, w2, actv="sigmoid",
                          x_block_budget=64 * 1024))
    ref2 = _reference(x2, w1, w2, "sigmoid")
    assert out2.shape == (B2, C, 1, 1), out2.shape
    assert jnp.allclose(out2, ref2, atol=1e-5, rtol=1e-5), "case 2 mismatch"

    print("KERNEL_OK")
</pallas_src>

<mosaic_0001>
module attributes {stable_mosaic.version = 11 : i64} {
  func.func @_channel_attention_kernel(%arg0: i32, %arg1: i32, %arg2: memref<2x32x256xf32, #tpu.memory_space<vmem>>, %arg3: memref<32x2xf32, #tpu.memory_space<vmem>>, %arg4: memref<2x32xf32, #tpu.memory_space<vmem>>, %arg5: memref<2x32xf32, #tpu.memory_space<vmem>>, %arg6: memref<2x32x1xf32, #tpu.memory_space<vmem>>, %arg7: memref<2x32x1xf32, #tpu.memory_space<vmem>>) attributes {dimension_semantics = [#tpu.dimension_semantics<parallel>, #tpu.dimension_semantics<arbitrary>], iteration_bounds = array<i64: 1, 1>, scalar_prefetch = 0 : i64, scratch_operands = 2 : i64, tpu.core_type = #tpu.core_type<tc>, window_params = [{transform_indices = @transform_0, window_bounds = array<i64: 2, 32, 256>}, {pipeline_mode = #tpu.pipeline_mode<synchronous>, transform_indices = @transform_1, window_bounds = array<i64: 32, 2>}, {pipeline_mode = #tpu.pipeline_mode<synchronous>, transform_indices = @transform_2, window_bounds = array<i64: 2, 32>}, {transform_indices = @transform_3, window_bounds = array<i64: 2, 32>}]} {
    %c0_i32 = arith.constant 0 : i32
    %0 = arith.cmpi eq, %arg1, %c0_i32 : i32
    %1 = arith.extui %0 : i1 to i32
    %c0_i32_0 = arith.constant 0 : i32
    %2 = arith.cmpi ne, %1, %c0_i32_0 : i32
    scf.if %2 {
      %cst_19 = arith.constant 0.000000e+00 : f32
      %19 = vector.broadcast %cst_19 : f32 to vector<2x32x1xf32>
      %c0_20 = arith.constant 0 : index
      %c0_21 = arith.constant 0 : index
      %c0_22 = arith.constant 0 : index
      %20 = vector.load %arg6[%c0_20, %c0_21, %c0_22] : memref<2x32x1xf32, #tpu.memory_space<vmem>>, vector<2x32x1xf32>
      tpu.vector_store %arg6[%c0_20, %c0_21, %c0_22], %19 {strides = array<i32>} : memref<2x32x1xf32, #tpu.memory_space<vmem>>, vector<2x32x1xf32>,
      %cst_23 = arith.constant 0.000000e+00 : f32
      %21 = vector.broadcast %cst_23 : f32 to vector<2x32x1xf32>
      %c0_24 = arith.constant 0 : index
      %c0_25 = arith.constant 0 : index
      %c0_26 = arith.constant 0 : index
      %22 = vector.load %arg7[%c0_24, %c0_25, %c0_26] : memref<2x32x1xf32, #tpu.memory_space<vmem>>, vector<2x32x1xf32>
      tpu.vector_store %arg7[%c0_24, %c0_25, %c0_26], %21 {strides = array<i32>} : memref<2x32x1xf32, #tpu.memory_space<vmem>>, vector<2x32x1xf32>,
    } else {
    }
    %c0 = arith.constant 0 : index
    %c0_1 = arith.constant 0 : index
    %c0_2 = arith.constant 0 : index
    %3 = vector.load %arg2[%c0, %c0_1, %c0_2] : memref<2x32x256xf32, #tpu.memory_space<vmem>>, vector<2x32x256xf32>
    %cst = arith.constant 0.000000e+00 : f32
    %4 = vector.broadcast %cst : f32 to vector<2x32x256xf32>
    %5 = arith.maximumf %3, %4 : vector<2x32x256xf32>
    %c0_3 = arith.constant 0 : index
    %c0_4 = arith.constant 0 : index
    %c0_5 = arith.constant 0 : index
    %6 = vector.load %arg6[%c0_3, %c0_4, %c0_5] : memref<2x32x1xf32, #tpu.memory_space<vmem>>, vector<2x32x1xf32>
    %cst_6 = arith.constant dense<0.000000e+00> : vector<2x32xf32>
    %7 = vector.multi_reduction <add>, %5, %cst_6 [2] : vector<2x32x256xf32> to vector<2x32xf32>
    %8 = vector.shape_cast %7 : vector<2x32xf32> to vector<2x32x1xf32>
    %9 = arith.addf %6, %8 : vector<2x32x1xf32>
    %c0_7 = arith.constant 0 : index
    %c0_8 = arith.constant 0 : index
    %c0_9 = arith.constant 0 : index
    %10 = vector.load %arg6[%c0_7, %c0_8, %c0_9] : memref<2x32x1xf32, #tpu.memory_space<vmem>>, vector<2x32x1xf32>
    tpu.vector_store %arg6[%c0_7, %c0_8, %c0_9], %9 {strides = array<i32>} : memref<2x32x1xf32, #tpu.memory_space<vmem>>, vector<2x32x1xf32>,
    %c0_10 = arith.constant 0 : index
    %c0_11 = arith.constant 0 : index
    %c0_12 = arith.constant 0 : index
    %11 = vector.load %arg7[%c0_10, %c0_11, %c0_12] : memref<2x32x1xf32, #tpu.memory_space<vmem>>, vector<2x32x1xf32>
    %cst_13 = arith.constant dense<0xFF800000> : vector<2x32xf32>
    %12 = vector.multi_reduction <maximumf>, %5, %cst_13 [2] : vector<2x32x256xf32> to vector<2x32xf32>
    %13 = vector.shape_cast %12 : vector<2x32xf32> to vector<2x32x1xf32>
    %14 = arith.maximumf %11, %13 : vector<2x32x1xf32>
    %c0_14 = arith.constant 0 : index
    %c0_15 = arith.constant 0 : index
    %c0_16 = arith.constant 0 : index
    %15 = vector.load %arg7[%c0_14, %c0_15, %c0_16] : memref<2x32x1xf32, #tpu.memory_space<vmem>>, vector<2x32x1xf32>
    tpu.vector_store %arg7[%c0_14, %c0_15, %c0_16], %14 {strides = array<i32>} : memref<2x32x1xf32, #tpu.memory_space<vmem>>, vector<2x32x1xf32>,
    %c0_i32_17 = arith.constant 0 : i32
    %16 = arith.cmpi eq, %arg1, %c0_i32_17 : i32
    %17 = arith.extui %16 : i1 to i32
    %c0_i32_18 = arith.constant 0 : i32
    %18 = arith.cmpi ne, %17, %c0_i32_18 : i32
    scf.if %18 {
      %c0_19 = arith.constant 0 : index
      %c0_20 = arith.constant 0 : index
      %c0_21 = arith.constant 0 : index
      %19 = vector.load %arg6[%c0_19, %c0_20, %c0_21] : memref<2x32x1xf32, #tpu.memory_space<vmem>>, vector<2x32x1xf32>
      %cst_22 = arith.constant dense<0.000000e+00> : vector<2x32xf32>
      %20 = vector.multi_reduction <add>, %19, %cst_22 [2] : vector<2x32x1xf32> to vector<2x32xf32>
      %cst_23 = arith.constant 3.906250e-03 : f32
      %21 = vector.broadcast %cst_23 : f32 to vector<2x32xf32>
      %22 = arith.mulf %20, %21 : vector<2x32xf32>
      %c0_24 = arith.constant 0 : index
      %c0_25 = arith.constant 0 : index
      %c0_26 = arith.constant 0 : index
      %23 = vector.load %arg7[%c0_24, %c0_25, %c0_26] : memref<2x32x1xf32, #tpu.memory_space<vmem>>, vector<2x32x1xf32>
      %cst_27 = arith.constant dense<0xFF800000> : vector<2x32xf32>
      %24 = vector.multi_reduction <maximumf>, %23, %cst_27 [2] : vector<2x32x1xf32> to vector<2x32xf32>
      %c0_28 = arith.constant 0 : index
      %c0_29 = arith.constant 0 : index
      %25 = vector.load %arg3[%c0_28, %c0_29] : memref<32x2xf32, #tpu.memory_space<vmem>>, vector<32x2xf32>
      %c0_30 = arith.constant 0 : index
      %c0_31 = arith.constant 0 : index
      %26 = vector.load %arg4[%c0_30, %c0_31] : memref<2x32xf32, #tpu.memory_space<vmem>>, vector<2x32xf32>
      %cst_32 = arith.constant dense<0.000000e+00> : vector<2x2xf32>
      %27 = tpu.matmul %22, %25, %cst_32 {dimension_numbers = #tpu.dot_dimension_numbers<[1], [0], [0], [1], [0, 0, 1, 1], [], []>} : vector<2x32xf32>, vector<32x2xf32>, vector<2x2xf32> -> vector<2x2xf32>
      %cst_33 = arith.constant 0.000000e+00 : f32
      %28 = vector.broadcast %cst_33 : f32 to vector<2x2xf32>
      %29 = arith.maximumf %27, %28 : vector<2x2xf32>
      %cst_34 = arith.constant dense<0.000000e+00> : vector<2x2xf32>
      %30 = tpu.matmul %24, %25, %cst_34 {dimension_numbers = #tpu.dot_dimension_numbers<[1], [0], [0], [1], [0, 0, 1, 1], [], []>} : vector<2x32xf32>, vector<32x2xf32>, vector<2x2xf32> -> vector<2x2xf32>
      %cst_35 = arith.constant 0.000000e+00 : f32
      %31 = vector.broadcast %cst_35 : f32 to vector<2x2xf32>
      %32 = arith.maximumf %30, %31 : vector<2x2xf32>
      %33 = arith.addf %29, %32 : vector<2x2xf32>
      %cst_36 = arith.constant dense<0.000000e+00> : vector<2x32xf32>
      %34 = tpu.matmul %33, %26, %cst_36 {dimension_numbers = #tpu.dot_dimension_numbers<[1], [0], [0], [1], [0, 0, 1, 1], [], []>} : vector<2x2xf32>, vector<2x32xf32>, vector<2x32xf32> -> vector<2x32xf32>
      %35 = arith.negf %34 : vector<2x32xf32>
      %36 = math.exp %35 : vector<2x32xf32>
      %cst_37 = arith.constant 1.000000e+00 : f32
      %37 = vector.broadcast %cst_37 : f32 to vector<2x32xf32>
      %38 = arith.addf %37, %36 : vector<2x32xf32>
      %39 = arith.divf %37, %38 : vector<2x32xf32>
      %c0_38 = arith.constant 0 : index
      %c0_39 = arith.constant 0 : index
      %40 = vector.load %arg5[%c0_38, %c0_39] : memref<2x32xf32, #tpu.memory_space<vmem>>, vector<2x32xf32>
      tpu.vector_store %arg5[%c0_38, %c0_39], %39 {strides = array<i32>} : memref<2x32xf32, #tpu.memory_space<vmem>>, vector<2x32xf32>,
    } else {
    }
    return
  }
  func.func @transform_0(%arg0: i32, %arg1: i32) -> (i32, i32, i32) {
    %c0_i32 = arith.constant 0 : i32
    %c0_i32_0 = arith.constant 0 : i32
    return %arg0, %c0_i32, %arg1 : i32, i32, i32
  }
  func.func @transform_1(%arg0: i32, %arg1: i32) -> (i32, i32) {
    %c0_i32 = arith.constant 0 : i32
    %c0_i32_0 = arith.constant 0 : i32
    %c0_i32_1 = arith.constant 0 : i32
    return %c0_i32, %c0_i32_0 : i32, i32
  }
  func.func @transform_2(%arg0: i32, %arg1: i32) -> (i32, i32) {
    %c0_i32 = arith.constant 0 : i32
    %c0_i32_0 = arith.constant 0 : i32
    %c0_i32_1 = arith.constant 0 : i32
    return %c0_i32, %c0_i32_0 : i32, i32
  }
  func.func @transform_3(%arg0: i32, %arg1: i32) -> (i32, i32) {
    %c0_i32 = arith.constant 0 : i32
    %c0_i32_0 = arith.constant 0 : i32
    return %arg0, %c0_i32 : i32, i32
  }
}

</mosaic_0001>

<llo_original>
// kernel: tpu_custom_call.1
$region0: #{tpu_custom_call.1}
  #allocation0 [shape = 'u32[]', space=smem, size = 0x4, offset = 0x4, fixed_abs, tag = 'smem constant byte address 0x4 - core index']
  #allocation1 [shape = 'u32[144,128]{1,0:T(1,128)}', space=vmem, size = 0x12000, scoped, tag = 'internal scratch']
  #allocation2 [shape = 'f32[2,32,1]{2,1,0:T(8,128)}', space=vmem, size = 0x8000, scoped, tag = 'scratch operand']
  #allocation3 [shape = 'f32[2,32,1]{2,1,0:T(8,128)}', space=vmem, size = 0x8000, scoped, tag = 'scratch operand']
  %s0 = inlined_call_operand.hbm [shape: f32[2,32,256], index: 0, kind: input, shape index: {}]
  %s1 = inlined_call_operand.vmem [shape: f32[32,2], index: 1, kind: input, shape index: {}]
  %s2 = inlined_call_operand.vmem [shape: f32[2,32], index: 2, kind: input, shape index: {}]
  %s3 = inlined_call_operand.hbm [shape: f32[2,32], index: 3, kind: output, shape index: {}]
  %s4 = sld [smem:[#allocation0]]
  $region34: #{tpu_custom_call.1} parent=0
    _
  %s6 = ssub.s32 1, %s4
  %s7 = scalar_select 0, %s6, %s4
  $region1: #{tpu_custom_call.1} parent=0
    #allocation4 [shape = 'u8[65536]{0}', space=vmem, size = 0x10000, scoped, tag = 'input window, operand 0, single buffered']
    #allocation5 [shape = 's32[1]{0}', space=sflag, size = 0x4, scoped, tag = 'scoped memory for tpu_custom_call.1']
    #allocation6 [shape = 's32[1]{0}', space=sflag, size = 0x4, scoped, tag = 'scoped memory for tpu_custom_call.1']
    #allocation7 [shape = 'u8[1024]{0}', space=vmem, size = 0x400, scoped, tag = 'output window, operand 0, single buffered']
    %8 = vsyncpa [#allocation5], 0
    %9 = vsyncpa [#allocation6], 0
    // Predicated region
    $region2: #{tpu_custom_call.1} parent=1 // pred_check
      _
    $region3: #{tpu_custom_call.1} parent=1 // pred_check_branch
      %11 = sbr.rel (0) target = $region5
    $region4: #{tpu_custom_call.1} parent=1 // pred_region
      %s13 = ssub.s32 2048, 2048
      %14 = vsyncadd [#allocation5], %s13
      %s15 = sshll.u32 [#allocation4], 4
      %s16 = int_to_ptr.vmem [resolvable:$true] %s15
      %21 = dma.hbm_to_vmem [thread:$0]  %s0, 2048, %s16, [#allocation5], 256, 256, 16
    $region5: #{tpu_custom_call.1} parent=1 // pred_fallthru
      _
    // Predicated region
    $region6: #{tpu_custom_call.1} parent=1 // pred_check
      _
    $region7: #{tpu_custom_call.1} parent=1 // pred_check_branch
      %23 = sbr.rel (0) target = $region9
    $region8: #{tpu_custom_call.1} parent=1 // pred_region
      _
    $region9: #{tpu_custom_call.1} parent=1 // pred_fallthru
      _
    // Predicated region
    $region10: #{tpu_custom_call.1} parent=1 // pred_check
      _
    $region11: #{tpu_custom_call.1} parent=1 // pred_check_branch
      %25 = sbr.rel (0) target = $region13
    $region12: #{tpu_custom_call.1} parent=1 // pred_region
      _
    $region13: #{tpu_custom_call.1} parent=1 // pred_fallthru
      _
    // Predicated region
    $region14: #{tpu_custom_call.1} parent=1 // pred_check
      _
    $region15: #{tpu_custom_call.1} parent=1 // pred_check_branch
      %27 = sbr.rel (0) target = $region17
    $region16: #{tpu_custom_call.1} parent=1 // pred_region
      %28 = dma.done [#allocation5], 2048
    $region17: #{tpu_custom_call.1} parent=1 // pred_fallthru
      _
    %p29 = scmp.eq.s32.totalorder 0, 0
    // Predicated region
    $region18: #{tpu_custom_call.1} parent=1 // pred_check
      %p30 = pneg %p29
    $region19: #{tpu_custom_call.1} parent=1 // pred_check_branch
      %32 = sbr.rel (%p30) target = $region21
    $region20: #{tpu_custom_call.1} parent=1 // pred_region
      %vm33 = vcmask 7168
      %34 = vst.msk [vmem:[#allocation2] sm:$0xff] %vm33, 0.0
      %35 = vst.msk [vmem:[#allocation2 + $0x8] sm:$0xff] %vm33, 0.0
      %36 = vst.msk [vmem:[#allocation2 + $0x10] sm:$0xff] %vm33, 0.0
      %37 = vst.msk [vmem:[#allocation2 + $0x18] sm:$0xff] %vm33, 0.0
      %38 = vst.msk [vmem:[#allocation2 + $0x20] sm:$0xff] %vm33, 0.0
      %39 = vst.msk [vmem:[#allocation2 + $0x28] sm:$0xff] %vm33, 0.0
      %40 = vst.msk [vmem:[#allocation2 + $0x30] sm:$0xff] %vm33, 0.0
      %41 = vst.msk [vmem:[#allocation2 + $0x38] sm:$0xff] %vm33, 0.0
      %42 = vst.msk [vmem:[#allocation3] sm:$0xff] %vm33, 0.0
      %43 = vst.msk [vmem:[#allocation3 + $0x8] sm:$0xff] %vm33, 0.0
      %44 = vst.msk [vmem:[#allocation3 + $0x10] sm:$0xff] %vm33, 0.0
      %45 = vst.msk [vmem:[#allocation3 + $0x18] sm:$0xff] %vm33, 0.0
      %46 = vst.msk [vmem:[#allocation3 + $0x20] sm:$0xff] %vm33, 0.0
      %47 = vst.msk [vmem:[#allocation3 + $0x28] sm:$0xff] %vm33, 0.0
      %48 = vst.msk [vmem:[#allocation3 + $0x30] sm:$0xff] %vm33, 0.0
      %49 = vst.msk [vmem:[#allocation3 + $0x38] sm:$0xff] %vm33, 0.0
    $region21: #{tpu_custom_call.1} parent=1 // pred_fallthru
      _
    %v50 = vld [vmem:[#allocation4] sm:$0xff]
    %v51 = vld [vmem:[#allocation4 + $0x8] sm:$0xff]
    %v52 = vld [vmem:[#allocation4 + $0x10] sm:$0xff]
    %v53 = vld [vmem:[#allocation4 + $0x18] sm:$0xff]
    %v54 = vld [vmem:[#allocation4 + $0x20] sm:$0xff]
    %v55 = vld [vmem:[#allocation4 + $0x28] sm:$0xff]
    %v56 = vld [vmem:[#allocation4 + $0x30] sm:$0xff]
    %v57 = vld [vmem:[#allocation4 + $0x38] sm:$0xff]
    %v58 = vld [vmem:[#allocation4 + $0x40] sm:$0xff]
    %v59 = vld [vmem:[#allocation4 + $0x48] sm:$0xff]
    %v60 = vld [vmem:[#allocation4 + $0x50] sm:$0xff]
    %v61 = vld [vmem:[#allocation4 + $0x58] sm:$0xff]
    %v62 = vld [vmem:[#allocation4 + $0x60] sm:$0xff]
    %v63 = vld [vmem:[#allocation4 + $0x68] sm:$0xff]
    %v64 = vld [vmem:[#allocation4 + $0x70] sm:$0xff]
    %v65 = vld [vmem:[#allocation4 + $0x78] sm:$0xff]
    %v66 = vmax.f32 %v50, 0.0
    %v67 = vmax.f32 %v51, 0.0
    %v68 = vmax.f32 %v52, 0.0
    %v69 = vmax.f32 %v53, 0.0
    %v70 = vmax.f32 %v54, 0.0
    %v71 = vmax.f32 %v55, 0.0
    %v72 = vmax.f32 %v56, 0.0
    %v73 = vmax.f32 %v57, 0.0
    %v74 = vmax.f32 %v58, 0.0
    %v75 = vmax.f32 %v59, 0.0
    %v76 = vmax.f32 %v60, 0.0
    %v77 = vmax.f32 %v61, 0.0
    %v78 = vmax.f32 %v62, 0.0
    %v79 = vmax.f32 %v63, 0.0
    %v80 = vmax.f32 %v64, 0.0
    %v81 = vmax.f32 %v65, 0.0
    %v82 = vld [vmem:[#allocation2] sm:$0xff]
    %v83 = vld [vmem:[#allocation2 + $0x8] sm:$0xff]
    %v84 = vld [vmem:[#allocation2 + $0x10] sm:$0xff]
    %v85 = vld [vmem:[#allocation2 + $0x18] sm:$0xff]
    %v86 = vld [vmem:[#allocation2 + $0x20] sm:$0xff]
    %v87 = vld [vmem:[#allocation2 + $0x28] sm:$0xff]
    %v88 = vld [vmem:[#allocation2 + $0x30] sm:$0xff]
    %v89 = vld [vmem:[#allocation2 + $0x38] sm:$0xff]
    %v90 = vadd.f32 %v66, %v67
    %91 = vadd.xlane.f32.xlu0 %v90
    %v92 = vpop.xlane.xlu0 %91
    %v93 = vadd.f32 %v68, %v69
    %94 = vadd.xlane.f32.xlu0 %v93
    %v95 = vpop.xlane.xlu0 %94
    %v96 = vadd.f32 %v70, %v71
    %97 = vadd.xlane.f32.xlu0 %v96
    %v98 = vpop.xlane.xlu0 %97
    %v99 = vadd.f32 %v72, %v73
    %100 = vadd.xlane.f32.xlu0 %v99
    %v101 = vpop.xlane.xlu0 %100
    %v102 = vadd.f32 %v74, %v75
    %103 = vadd.xlane.f32.xlu0 %v102
    %v104 = vpop.xlane.xlu0 %103
    %v105 = vadd.f32 %v76, %v77
    %106 = vadd.xlane.f32.xlu0 %v105
    %v107 = vpop.xlane.xlu0 %106
    %v108 = vadd.f32 %v78, %v79
    %109 = vadd.xlane.f32.xlu0 %v108
    %v110 = vpop.xlane.xlu0 %109
    %v111 = vadd.f32 %v80, %v81
    %112 = vadd.xlane.f32.xlu0 %v111
    %v113 = vpop.xlane.xlu0 %112
    %v114 = vadd.f32 %v82, %v92
    %v115 = vadd.f32 %v83, %v95
    %v116 = vadd.f32 %v84, %v98
    %v117 = vadd.f32 %v85, %v101
    %v118 = vadd.f32 %v86, %v104
    %v119 = vadd.f32 %v87, %v107
    %v120 = vadd.f32 %v88, %v110
    %v121 = vadd.f32 %v89, %v113
    %vm122 = vcmask 7168
    %123 = vst.msk [vmem:[#allocation2] sm:$0xff] %vm122, %v114
    %124 = vst.msk [vmem:[#allocation2 + $0x8] sm:$0xff] %vm122, %v115
    %125 = vst.msk [vmem:[#allocation2 + $0x10] sm:$0xff] %vm122, %v116
    %126 = vst.msk [vmem:[#allocation2 + $0x18] sm:$0xff] %vm122, %v117
    %127 = vst.msk [vmem:[#allocation2 + $0x20] sm:$0xff] %vm122, %v118
    %128 = vst.msk [vmem:[#allocation2 + $0x28] sm:$0xff] %vm122, %v119
    %129 = vst.msk [vmem:[#allocation2 + $0x30] sm:$0xff] %vm122, %v120
    %130 = vst.msk [vmem:[#allocation2 + $0x38] sm:$0xff] %vm122, %v121
    %v131 = vld [vmem:[#allocation3] sm:$0xff]
    %v132 = vld [vmem:[#allocation3 + $0x8] sm:$0xff]
    %v133 = vld [vmem:[#allocation3 + $0x10] sm:$0xff]
    %v134 = vld [vmem:[#allocation3 + $0x18] sm:$0xff]
    %v135 = vld [vmem:[#allocation3 + $0x20] sm:$0xff]
    %v136 = vld [vmem:[#allocation3 + $0x28] sm:$0xff]
    %v137 = vld [vmem:[#allocation3 + $0x30] sm:$0xff]
    %v138 = vld [vmem:[#allocation3 + $0x38] sm:$0xff]
    %v139 = vmax.f32 %v66, %v67
    %140 = vmax.xlane.f32.xlu0 %v139
    %v141 = vpop.xlane.xlu0 %140
    %v142 = vmax.f32 %v68, %v69
    %143 = vmax.xlane.f32.xlu0 %v142
    %v144 = vpop.xlane.xlu0 %143
    %v145 = vmax.f32 %v70, %v71
    %146 = vmax.xlane.f32.xlu0 %v145
    %v147 = vpop.xlane.xlu0 %146
    %v148 = vmax.f32 %v72, %v73
    %149 = vmax.xlane.f32.xlu0 %v148
    %v150 = vpop.xlane.xlu0 %149
    %v151 = vmax.f32 %v74, %v75
    %152 = vmax.xlane.f32.xlu0 %v151
    %v153 = vpop.xlane.xlu0 %152
    %v154 = vmax.f32 %v76, %v77
    %155 = vmax.xlane.f32.xlu0 %v154
    %v156 = vpop.xlane.xlu0 %155
    %v157 = vmax.f32 %v78, %v79
    %158 = vmax.xlane.f32.xlu0 %v157
    %v159 = vpop.xlane.xlu0 %158
    %v160 = vmax.f32 %v80, %v81
    %161 = vmax.xlane.f32.xlu0 %v160
    %v162 = vpop.xlane.xlu0 %161
    %v163 = vmax.f32 %v131, %v141
    %v164 = vmax.f32 %v132, %v144
    %v165 = vmax.f32 %v133, %v147
    %v166 = vmax.f32 %v134, %v150
    %v167 = vmax.f32 %v135, %v153
    %v168 = vmax.f32 %v136, %v156
    %v169 = vmax.f32 %v137, %v159
    %v170 = vmax.f32 %v138, %v162
    %171 = vst.msk [vmem:[#allocation3] sm:$0xff] %vm122, %v163
    %172 = vst.msk [vmem:[#allocation3 + $0x8] sm:$0xff] %vm122, %v164
    %173 = vst.msk [vmem:[#allocation3 + $0x10] sm:$0xff] %vm122, %v165
    %174 = vst.msk [vmem:[#allocation3 + $0x18] sm:$0xff] %vm122, %v166
    %175 = vst.msk [vmem:[#allocation3 + $0x20] sm:$0xff] %vm122, %v167
    %176 = vst.msk [vmem:[#allocation3 + $0x28] sm:$0xff] %vm122, %v168
    %177 = vst.msk [vmem:[#allocation3 + $0x30] sm:$0xff] %vm122, %v169
    %178 = vst.msk [vmem:[#allocation3 + $0x38] sm:$0xff] %vm122, %v170
    // Predicated region
    $region22: #{tpu_custom_call.1} parent=1 // pred_check
      %p179 = pneg %p29
    $region23: #{tpu_custom_call.1} parent=1 // pred_check_branch
      %181 = sbr.rel (%p179) target = $region25
    $region24: #{tpu_custom_call.1} parent=1 // pred_region
      %v182 = vld [vmem:[#allocation2] sm:$0xff]
      %v183 = vld [vmem:[#allocation2 + $0x8] sm:$0xff]
      %v184 = vld [vmem:[#allocation2 + $0x10] sm:$0xff]
      %v185 = vld [vmem:[#allocation2 + $0x18] sm:$0xff]
      %v186 = vld [vmem:[#allocation2 + $0x20] sm:$0xff]
      %v187 = vld [vmem:[#allocation2 + $0x28] sm:$0xff]
      %v188 = vld [vmem:[#allocation2 + $0x30] sm:$0xff]
      %v189 = vld [vmem:[#allocation2 + $0x38] sm:$0xff]
      %v190 = vadd.f32 %v182, 0.0
      %v191 = vadd.f32 %v183, 0.0
      %v192 = vadd.f32 %v184, 0.0
      %v193 = vadd.f32 %v185, 0.0
      %v194 = vadd.f32 %v186, 0.0
      %v195 = vadd.f32 %v187, 0.0
      %v196 = vadd.f32 %v188, 0.0
      %v197 = vadd.f32 %v189, 0.0
      %v198 = vmul.f32 %v190, 0.00390625
      %v199 = vmul.f32 %v191, 0.00390625
      %v200 = vmul.f32 %v192, 0.00390625
      %v201 = vmul.f32 %v193, 0.00390625
      %v202 = vmul.f32 %v194, 0.00390625
      %v203 = vmul.f32 %v195, 0.00390625
      %v204 = vmul.f32 %v196, 0.00390625
      %v205 = vmul.f32 %v197, 0.00390625
      %v206 = vld [vmem:[#allocation3] sm:$0xff]
      %v207 = vld [vmem:[#allocation3 + $0x8] sm:$0xff]
      %v208 = vld [vmem:[#allocation3 + $0x10] sm:$0xff]
      %v209 = vld [vmem:[#allocation3 + $0x18] sm:$0xff]
      %v210 = vld [vmem:[#allocation3 + $0x20] sm:$0xff]
      %v211 = vld [vmem:[#allocation3 + $0x28] sm:$0xff]
      %v212 = vld [vmem:[#allocation3 + $0x30] sm:$0xff]
      %v213 = vld [vmem:[#allocation3 + $0x38] sm:$0xff]
      %v214 = vld [vmem:[%s1] sm:$0xff]
      %v215 = vld [vmem:[%s1 + $0x8] sm:$0xff]
      %v216 = vld [vmem:[%s1 + $0x10] sm:$0xff]
      %v217 = vld [vmem:[%s1 + $0x18] sm:$0xff]
      %v218 = vld [vmem:[%s2] sm:$0x3]
      %227 = vset.pattern.permute.xlu0 0
      %228 = vperm.xlu0 %227, %v198
      %v229 = vpop.permute.xlu0 %228
      %230 = vset.pattern.permute.xlu0 0
      %231 = vperm.xlu0 %230, %v199
      %v232 = vpop.permute.xlu0 %231
      %233 = vset.pattern.permute.xlu0 0
      %234 = vperm.xlu0 %233, %v200
      %v235 = vpop.permute.xlu0 %234
      %236 = vset.pattern.permute.xlu0 0
      %237 = vperm.xlu0 %236, %v201
      %v238 = vpop.permute.xlu0 %237
      %239 = vset.pattern.permute.xlu0 0
      %240 = vperm.xlu0 %239, %v202
      %v241 = vpop.permute.xlu0 %240
      %242 = vset.pattern.permute.xlu0 0
      %243 = vperm.xlu0 %242, %v203
      %v244 = vpop.permute.xlu0 %243
      %245 = vset.pattern.permute.xlu0 0
      %246 = vperm.xlu0 %245, %v204
      %v247 = vpop.permute.xlu0 %246
      %248 = vset.pattern.permute.xlu0 0
      %249 = vperm.xlu0 %248, %v205
      %v250 = vpop.permute.xlu0 %249
      %v251 = vlaneseq
      %v252 = vand.u32 %v251, 127
      %v253 = vlaneseq
      %v254 = vshrl.u32 %v253, 7
      %v255 = vsub.s32 %v252, %v254
      %v256 = vrot.slane %v229, %v255
      %v257 = vadd.s32 %v252, 4294967288
      %v258 = vlaneseq
      %v259 = vshrl.u32 %v258, 7
      %v260 = vsub.s32 %v257, %v259
      %v261 = vrot.slane %v232, %v260
      %vm262 = vcmask 130112
      %v263 = vsel %vm262, %v261, %v256
      %v264 = vadd.s32 %v252, 4294967280
      %v265 = vlaneseq
      %v266 = vshrl.u32 %v265, 7
      %v267 = vsub.s32 %v264, %v266
      %v268 = vrot.slane %v235, %v267
      %vm269 = vcmask 195712
      %v270 = vsel %vm269, %v268, %v263
      %v271 = vadd.s32 %v252, 4294967272
      %v272 = vlaneseq
      %v273 = vshrl.u32 %v272, 7
      %v274 = vsub.s32 %v271, %v273
      %v275 = vrot.slane %v238, %v274
      %vm276 = vcmask 261312
      %v277 = vsel %vm276, %v275, %v270
      %v278 = vlaneseq
      %v279 = vshrl.u32 %v278, 7
      %v280 = vsub.s32 %v252, %v279
      %v281 = vrot.slane %v241, %v280
      %v282 = vlaneseq
      %v283 = vshrl.u32 %v282, 7
      %v284 = vsub.s32 %v257, %v283
      %v285 = vrot.slane %v244, %v284
      %v286 = vsel %vm262, %v285, %v281
      %v287 = vlaneseq
      %v288 = vshrl.u32 %v287, 7
      %v289 = vsub.s32 %v264, %v288
      %v290 = vrot.slane %v247, %v289
      %v291 = vsel %vm269, %v290, %v286
      %v292 = vlaneseq
      %v293 = vshrl.u32 %v292, 7
      %v294 = vsub.s32 %v271, %v293
      %v295 = vrot.slane %v250, %v294
      %v296 = vsel %vm276, %v295, %v291
      %vm297 = vcmask 1041409
      %v298 = vsel %vm297, %v296, %v277
      %vm299 = vcmask 261120
      %v300 = vsel %vm299, %v298, 0
      %302 = vmatprep.subr.mxu0 0.0
      %303 = vmatpush1.msra.mxu0 %v214
      %304 = vmatprep.subr.mxu0 0.0
      %305 = vmatpush1.msra.mxu0 %v215
      %306 = vmatprep.subr.mxu0 0.0
      %307 = vmatpush1.msra.mxu0 %v216
      %308 = vmatprep.subr.mxu0 0.0
      %309 = vmatpush1.msra.mxu0 %v217
      %310 = vmatprep.subr.mxu0 0.0
      %311 = vmatpush1.msra.mxu0 0.0
      %312 = vmatprep.subr.mxu0 0.0
      %313 = vmatpush1.msra.mxu0 0.0
      %314 = vmatprep.subr.mxu0 0.0
      %315 = vmatpush1.msra.mxu0 0.0
      %316 = vmatprep.subr.mxu0 0.0
      %317 = vmatpush1.msra.mxu0 0.0
      %318 = vmatprep.subr.mxu0 0.0
      %319 = vmatpush1.msra.mxu0 0.0
      %320 = vmatprep.subr.mxu0 0.0
      %321 = vmatpush1.msra.mxu0 0.0
      %322 = vmatprep.subr.mxu0 0.0
      %323 = vmatpush1.msra.mxu0 0.0
      %324 = vmatprep.subr.mxu0 0.0
      %325 = vmatpush1.msra.mxu0 0.0
      %326 = vmatprep.subr.mxu0 0.0
      %327 = vmatpush1.msra.mxu0 0.0
      %328 = vmatprep.subr.mxu0 0.0
      %329 = vmatpush1.msra.mxu0 0.0
      %330 = vmatprep.subr.mxu0 0.0
      %331 = vmatpush1.msra.mxu0 0.0
      %332 = vmatprep.subr.mxu0 0.0
      %333 = vmatpush1.msra.mxu0 0.0
      %334 = vmatprep.subr.mxu0 0.0
      %335 = vmatpush1.msra.mxu0 0.0
      %336 = vmatprep.subr.mxu0 0.0
      %337 = vmatpush1.msra.mxu0 0.0
      %338 = vmatprep.subr.mxu0 0.0
      %339 = vmatpush1.msra.mxu0 0.0
      %340 = vmatprep.subr.mxu0 0.0
      %341 = vmatpush1.msra.mxu0 0.0
      %342 = vmatprep.subr.mxu0 0.0
      %343 = vmatpush1.msra.mxu0 0.0
      %344 = vmatprep.subr.mxu0 0.0
      %345 = vmatpush1.msra.mxu0 0.0
      %346 = vmatprep.subr.mxu0 0.0
      %347 = vmatpush1.msra.mxu0 0.0
      %348 = vmatprep.subr.mxu0 0.0
      %349 = vmatpush1.msra.mxu0 0.0
      %350 = vmatprep.subr.mxu0 0.0
      %351 = vmatpush1.msra.mxu0 0.0
      %352 = vmatprep.subr.mxu0 0.0
      %353 = vmatpush1.msra.mxu0 0.0
      %354 = vmatprep.subr.mxu0 0.0
      %355 = vmatpush1.msra.mxu0 0.0
      %356 = vmatprep.subr.mxu0 0.0
      %357 = vmatpush1.msra.mxu0 0.0
      %358 = vmatprep.subr.mxu0 0.0
      %359 = vmatpush1.msra.mxu0 0.0
      %360 = vmatprep.subr.mxu0 0.0
      %361 = vmatpush1.msra.mxu0 0.0
      %362 = vmatprep.subr.mxu0 0.0
      %363 = vmatpush1.msra.mxu0 0.0
      %364 = vmatprep.subr.mxu0 0.0
      %365 = vmatpush1.msra.mxu0 0.0
      %366 = vmatprep.mubr.f32.mxu0 0.0
      %367 = vmatmul.mubr.f32.gmra.mrb[0].mxu0 %v300
      %v368 = vpop.f32.mrb[0].mxu0
      %v369 = vadd.f32 0.0, %v368
      %v370 = vpop.f32.mrb[0].mxu0
      %371 = vdwg.mxu0
      %v372 = vmax.f32 %v369, 0.0
      %381 = vset.pattern.permute.xlu0 0
      %382 = vperm.xlu0 %381, %v206
      %v383 = vpop.permute.xlu0 %382
      %384 = vset.pattern.permute.xlu0 0
      %385 = vperm.xlu0 %384, %v207
      %v386 = vpop.permute.xlu0 %385
      %387 = vset.pattern.permute.xlu0 0
      %388 = vperm.xlu0 %387, %v208
      %v389 = vpop.permute.xlu0 %388
      %390 = vset.pattern.permute.xlu0 0
      %391 = vperm.xlu0 %390, %v209
      %v392 = vpop.permute.xlu0 %391
      %393 = vset.pattern.permute.xlu0 0
      %394 = vperm.xlu0 %393, %v210
      %v395 = vpop.permute.xlu0 %394
      %396 = vset.pattern.permute.xlu0 0
      %397 = vperm.xlu0 %396, %v211
      %v398 = vpop.permute.xlu0 %397
      %399 = vset.pattern.permute.xlu0 0
      %400 = vperm.xlu0 %399, %v212
      %v401 = vpop.permute.xlu0 %400
      %402 = vset.pattern.permute.xlu0 0
      %403 = vperm.xlu0 %402, %v213
      %v404 = vpop.permute.xlu0 %403
      %v405 = vlaneseq
      %v406 = vshrl.u32 %v405, 7
      %v407 = vsub.s32 %v252, %v406
      %v408 = vrot.slane %v383, %v407
      %v409 = vlaneseq
      %v410 = vshrl.u32 %v409, 7
      %v411 = vsub.s32 %v257, %v410
      %v412 = vrot.slane %v386, %v411
      %v413 = vsel %vm262, %v412, %v408
      %v414 = vlaneseq
      %v415 = vshrl.u32 %v414, 7
      %v416 = vsub.s32 %v264, %v415
      %v417 = vrot.slane %v389, %v416
      %v418 = vsel %vm269, %v417, %v413
      %v419 = vlaneseq
      %v420 = vshrl.u32 %v419, 7
      %v421 = vsub.s32 %v271, %v420
      %v422 = vrot.slane %v392, %v421
      %v423 = vsel %vm276, %v422, %v418
      %v424 = vlaneseq
      %v425 = vshrl.u32 %v424, 7
      %v426 = vsub.s32 %v252, %v425
      %v427 = vrot.slane %v395, %v426
      %v428 = vlaneseq
      %v429 = vshrl.u32 %v428, 7
      %v430 = vsub.s32 %v257, %v429
      %v431 = vrot.slane %v398, %v430
      %v432 = vsel %vm262, %v431, %v427
      %v433 = vlaneseq
      %v434 = vshrl.u32 %v433, 7
      %v435 = vsub.s32 %v264, %v434
      %v436 = vrot.slane %v401, %v435
      %v437 = vsel %vm269, %v436, %v432
      %v438 = vlaneseq
      %v439 = vshrl.u32 %v438, 7
      %v440 = vsub.s32 %v271, %v439
      %v441 = vrot.slane %v404, %v440
      %v442 = vsel %vm276, %v441, %v437
      %v443 = vsel %vm297, %v442, %v423
      %v444 = vsel %vm299, %v443, 0
      %446 = vmatprep.subr.mxu0 0.0
      %447 = vmatpush1.msra.mxu0 %v214
      %448 = vmatprep.subr.mxu0 0.0
      %449 = vmatpush1.msra.mxu0 %v215
      %450 = vmatprep.subr.mxu0 0.0
      %451 = vmatpush1.msra.mxu0 %v216
      %452 = vmatprep.subr.mxu0 0.0
      %453 = vmatpush1.msra.mxu0 %v217
      %454 = vmatprep.subr.mxu0 0.0
      %455 = vmatpush1.msra.mxu0 0.0
      %456 = vmatprep.subr.mxu0 0.0
      %457 = vmatpush1.msra.mxu0 0.0
      %458 = vmatprep.subr.mxu0 0.0
      %459 = vmatpush1.msra.mxu0 0.0
      %460 = vmatprep.subr.mxu0 0.0
      %461 = vmatpush1.msra.mxu0 0.0
      %462 = vmatprep.subr.mxu0 0.0
      %463 = vmatpush1.msra.mxu0 0.0
      %464 = vmatprep.subr.mxu0 0.0
      %465 = vmatpush1.msra.mxu0 0.0
      %466 = vmatprep.subr.mxu0 0.0
      %467 = vmatpush1.msra.mxu0 0.0
      %468 = vmatprep.subr.mxu0 0.0
      %469 = vmatpush1.msra.mxu0 0.0
      %470 = vmatprep.subr.mxu0 0.0
      %471 = vmatpush1.msra.mxu0 0.0
      %472 = vmatprep.subr.mxu0 0.0
      %473 = vmatpush1.msra.mxu0 0.0
      %474 = vmatprep.subr.mxu0 0.0
      %475 = vmatpush1.msra.mxu0 0.0
      %476 = vmatprep.subr.mxu0 0.0
      %477 = vmatpush1.msra.mxu0 0.0
      %478 = vmatprep.subr.mxu0 0.0
      %479 = vmatpush1.msra.mxu0 0.0
      %480 = vmatprep.subr.mxu0 0.0
      %481 = vmatpush1.msra.mxu0 0.0
      %482 = vmatprep.subr.mxu0 0.0
      %483 = vmatpush1.msra.mxu0 0.0
      %484 = vmatprep.subr.mxu0 0.0
      %485 = vmatpush1.msra.mxu0 0.0
      %486 = vmatprep.subr.mxu0 0.0
      %487 = vmatpush1.msra.mxu0 0.0
      %488 = vmatprep.subr.mxu0 0.0
      %489 = vmatpush1.msra.mxu0 0.0
      %490 = vmatprep.subr.mxu0 0.0
      %491 = vmatpush1.msra.mxu0 0.0
      %492 = vmatprep.subr.mxu0 0.0
      %493 = vmatpush1.msra.mxu0 0.0
      %494 = vmatprep.subr.mxu0 0.0
      %495 = vmatpush1.msra.mxu0 0.0
      %496 = vmatprep.subr.mxu0 0.0
      %497 = vmatpush1.msra.mxu0 0.0
      %498 = vmatprep.subr.mxu0 0.0
      %499 = vmatpush1.msra.mxu0 0.0
      %500 = vmatprep.subr.mxu0 0.0
      %501 = vmatpush1.msra.mxu0 0.0
      %502 = vmatprep.subr.mxu0 0.0
      %503 = vmatpush1.msra.mxu0 0.0
      %504 = vmatprep.subr.mxu0 0.0
      %505 = vmatpush1.msra.mxu0 0.0
      %506 = vmatprep.subr.mxu0 0.0
      %507 = vmatpush1.msra.mxu0 0.0
      %508 = vmatprep.subr.mxu0 0.0
      %509 = vmatpush1.msra.mxu0 0.0
      %510 = vmatprep.mubr.f32.mxu0 0.0
      %511 = vmatmul.mubr.f32.gmra.mrb[0].mxu0 %v444
      %v512 = vpop.f32.mrb[0].mxu0
      %v513 = vadd.f32 0.0, %v512
      %v514 = vpop.f32.mrb[0].mxu0
      %515 = vdwg.mxu0
      %v516 = vmax.f32 %v513, 0.0
      %v517 = vadd.f32 %v372, %v516
      %vm518 = vcmask 15360
      %v520 = vsel %vm518, %v517, 0
      %vm522 = vcmask 1041408
      %v524 = vsel %vm522, %v218, 0
      %526 = vmatprep.subr.mxu0 0.0
      %527 = vmatpush1.msra.mxu0 %v524
      %528 = vmatprep.subr.mxu0 0.0
      %529 = vmatpush1.msra.mxu0 0.0
      %530 = vmatprep.subr.mxu0 0.0
      %531 = vmatpush1.msra.mxu0 0.0
      %532 = vmatprep.subr.mxu0 0.0
      %533 = vmatpush1.msra.mxu0 0.0
      %534 = vmatprep.subr.mxu0 0.0
      %535 = vmatpush1.msra.mxu0 0.0
      %536 = vmatprep.subr.mxu0 0.0
      %537 = vmatpush1.msra.mxu0 0.0
      %538 = vmatprep.subr.mxu0 0.0
      %539 = vmatpush1.msra.mxu0 0.0
      %540 = vmatprep.subr.mxu0 0.0
      %541 = vmatpush1.msra.mxu0 0.0
      %542 = vmatprep.subr.mxu0 0.0
      %543 = vmatpush1.msra.mxu0 0.0
      %544 = vmatprep.subr.mxu0 0.0
      %545 = vmatpush1.msra.mxu0 0.0
      %546 = vmatprep.subr.mxu0 0.0
      %547 = vmatpush1.msra.mxu0 0.0
      %548 = vmatprep.subr.mxu0 0.0
      %549 = vmatpush1.msra.mxu0 0.0
      %550 = vmatprep.subr.mxu0 0.0
      %551 = vmatpush1.msra.mxu0 0.0
      %552 = vmatprep.subr.mxu0 0.0
      %553 = vmatpush1.msra.mxu0 0.0
      %554 = vmatprep.subr.mxu0 0.0
      %555 = vmatpush1.msra.mxu0 0.0
      %556 = vmatprep.subr.mxu0 0.0
      %557 = vmatpush1.msra.mxu0 0.0
      %558 = vmatprep.subr.mxu0 0.0
      %559 = vmatpush1.msra.mxu0 0.0
      %560 = vmatprep.subr.mxu0 0.0
      %561 = vmatpush1.msra.mxu0 0.0
      %562 = vmatprep.subr.mxu0 0.0
      %563 = vmatpush1.msra.mxu0 0.0
      %564 = vmatprep.subr.mxu0 0.0
      %565 = vmatpush1.msra.mxu0 0.0
      %566 = vmatprep.subr.mxu0 0.0
      %567 = vmatpush1.msra.mxu0 0.0
      %568 = vmatprep.subr.mxu0 0.0
      %569 = vmatpush1.msra.mxu0 0.0
      %570 = vmatprep.subr.mxu0 0.0
      %571 = vmatpush1.msra.mxu0 0.0
      %572 = vmatprep.subr.mxu0 0.0
      %573 = vmatpush1.msra.mxu0 0.0
      %574 = vmatprep.subr.mxu0 0.0
      %575 = vmatpush1.msra.mxu0 0.0
      %576 = vmatprep.subr.mxu0 0.0
      %577 = vmatpush1.msra.mxu0 0.0
      %578 = vmatprep.subr.mxu0 0.0
      %579 = vmatpush1.msra.mxu0 0.0
      %580 = vmatprep.subr.mxu0 0.0
      %581 = vmatpush1.msra.mxu0 0.0
      %582 = vmatprep.subr.mxu0 0.0
      %583 = vmatpush1.msra.mxu0 0.0
      %584 = vmatprep.subr.mxu0 0.0
      %585 = vmatpush1.msra.mxu0 0.0
      %586 = vmatprep.subr.mxu0 0.0
      %587 = vmatpush1.msra.mxu0 0.0
      %588 = vmatprep.subr.mxu0 0.0
      %589 = vmatpush1.msra.mxu0 0.0
      %590 = vmatprep.mubr.f32.mxu0 0.0
      %591 = vmatmul.mubr.f32.gmra.mrb[0].mxu0 %v520
      %v592 = vpop.f32.mrb[0].mxu0
      %v593 = vadd.f32 0.0, %v592
      %v594 = vpop.f32.mrb[0].mxu0
      %595 = vdwg.mxu0
      %v596 = vxor.u32 %v593, 2147483648
      %v597 = vmul.f32 %v596, 1.442695
      %v598 = vpow.pop %v597
      %v599 = vadd.f32 %v598, 1.0
      %v600 = vrcp.pop %v599
      %v601 = vmul.f32 1.0, %v600
      %vm602 = vcmask 254976
      %603 = vst.msk [vmem:[#allocation7] sm:$0x3] %vm602, %v601
    $region25: #{tpu_custom_call.1} parent=1 // pred_fallthru
      _
    // Predicated region
    $region26: #{tpu_custom_call.1} parent=1 // pred_check
      _
    $region27: #{tpu_custom_call.1} parent=1 // pred_check_branch
      %605 = sbr.rel (0) target = $region29
    $region28: #{tpu_custom_call.1} parent=1 // pred_region
      %s607 = ssub.s32 32, 32
      %608 = vsyncadd [#allocation6], %s607
      %s610 = sshll.u32 [#allocation7], 4
      %s611 = int_to_ptr.vmem [resolvable:$true] %s610
      %613 = dma.vmem_to_hbm [thread:$0]  %s611, 32, %s3, [#allocation6]
    $region29: #{tpu_custom_call.1} parent=1 // pred_fallthru
      _
    // Predicated region
    $region30: #{tpu_custom_call.1} parent=1 // pred_check
      _
    $region31: #{tpu_custom_call.1} parent=1 // pred_check_branch
      %615 = sbr.rel (0) target = $region33
    $region32: #{tpu_custom_call.1} parent=1 // pred_region
      %616 = dma.done [#allocation6], 32
    $region33: #{tpu_custom_call.1} parent=1 // pred_fallthru
      _
    %617 = vsyncpa [#allocation5], 1
    %618 = vsyncpa [#allocation6], 1

</llo_original>
